<compile_context>
chip_gen: v5e
topology: v5e:2x2
jax: 0.10.0
libtpu: 0.0.40
codegen_flags: <defaults>
</compile_context>

<pallas_src>
import jax
import jax.numpy as jnp
from jax.experimental import pallas as pl
from jax.experimental.pallas import tpu as pltpu


def _round_up(x, m):
    return ((x + m - 1) // m) * m


def _mf_fused_kernel(item_ids_ref, user_ids_ref, item_tbl_ref, user_tbl_ref,
                     out_ref):
    # item_ids_ref: (TM, 1) int32      user_ids_ref: (TM, 1) int32
    # item_tbl_ref: (NI, D) f32        user_tbl_ref: (NU, D) f32   (resident)
    # out_ref:      (TM, 1)
    tm = out_ref.shape[0]
    ni = item_tbl_ref.shape[0]
    nu = user_tbl_ref.shape[0]

    # One-hot gather of item rows: item_rows[m, d] = item_tbl[item_ids[m], d].
    i_iota = jax.lax.broadcasted_iota(jnp.int32, (tm, ni), 1)
    onehot_i = (i_iota == item_ids_ref[...]).astype(jnp.float32)      # (TM, NI)
    item_rows = jnp.dot(onehot_i, item_tbl_ref[...],
                        preferred_element_type=jnp.float32)           # (TM, D)

    # One-hot gather of the (K-times repeated) user rows.
    u_iota = jax.lax.broadcasted_iota(jnp.int32, (tm, nu), 1)
    onehot_u = (u_iota == user_ids_ref[...]).astype(jnp.float32)      # (TM, NU)
    user_rows = jnp.dot(onehot_u, user_tbl_ref[...],
                        preferred_element_type=jnp.float32)           # (TM, D)

    # scores[m] = sum_d item_rows[m, d] * user_rows[m, d]  (exact f32 VPU/XLU).
    prod = item_rows * user_rows                                      # (TM, D)
    out_ref[...] = jnp.sum(prod, axis=-1, keepdims=True).astype(out_ref.dtype)


def mf_forward(item_ids, user_ids, item_table, user_table, tm=1024):
    """Fused MF forward: ids + tables -> scores [B, S, K]."""
    B, S, K = item_ids.shape
    D = item_table.shape[1]
    M = B * S * K                     # one "score row" per (batch, slate, item)

    # Pad tables to a lane-dense 128-row multiple (zero rows are never selected
    # by real ids; padded tail ids point at row 0 and get sliced off below).
    ni = _round_up(item_table.shape[0], 128)
    nu = _round_up(user_table.shape[0], 128)
    item_tbl = jnp.pad(item_table, ((0, ni - item_table.shape[0]), (0, 0)))
    user_tbl = jnp.pad(user_table, ((0, nu - user_table.shape[0]), (0, 0)))

    ids_i = item_ids.reshape(M, 1).astype(jnp.int32)
    ids_u = jnp.repeat(user_ids.reshape(B * S), K).reshape(M, 1).astype(jnp.int32)

    # Row-tile: multiple of 8, capped so tiny problems use a single grid step.
    tm = min(tm, _round_up(M, 8))
    m_pad = _round_up(M, tm)
    if m_pad != M:
        # Only the tiny int32 id arrays are padded (no full-tensor HBM copy).
        ids_i = jnp.pad(ids_i, ((0, m_pad - M), (0, 0)))
        ids_u = jnp.pad(ids_u, ((0, m_pad - M), (0, 0)))

    out = pl.pallas_call(
        _mf_fused_kernel,
        out_shape=jax.ShapeDtypeStruct((m_pad, 1), item_table.dtype),
        grid_spec=pltpu.PrefetchScalarGridSpec(
            num_scalar_prefetch=0,
            grid=(m_pad // tm,),
            in_specs=[
                pl.BlockSpec((tm, 1), lambda n: (n, 0)),   # item ids (streamed)
                pl.BlockSpec((tm, 1), lambda n: (n, 0)),   # user ids (streamed)
                pl.BlockSpec((ni, D), lambda n: (0, 0)),   # item table (resident)
                pl.BlockSpec((nu, D), lambda n: (0, 0)),   # user table (resident)
            ],
            out_specs=pl.BlockSpec((tm, 1), lambda n: (n, 0)),
        ),
        compiler_params=pltpu.CompilerParams(
            dimension_semantics=("parallel",),
            vmem_limit_bytes=32 * 1024 * 1024,
        ),
    )(ids_i, ids_u, item_tbl, user_tbl)

    return out[:M].reshape(B, S, K)


if __name__ == "__main__":
    key = jax.random.PRNGKey(0)
    B, S, K, D = 2, 8, 16, 32          # batch, slates, items per slate, emb dim
    n_items, n_users = 100, 20

    k1, k2, k3, k4 = jax.random.split(key, 4)
    # Deterministic stand-in for the `embedding` module: simple lookup tables.
    item_table = jax.random.normal(k1, (n_items, D), dtype=jnp.float32) * 0.1
    user_table = jax.random.normal(k2, (n_users, D), dtype=jnp.float32) * 0.1
    item_ids = jax.random.randint(k3, (B, S, K), 0, n_items)
    user_ids = jax.random.randint(k4, (B, S), 0, n_users)

    # Fused hot path: embedding lookup + broadcast-multiply + sum(-1) in Pallas.
    scores = mf_forward(item_ids, user_ids, item_table, user_table)
    scores = jax.block_until_ready(scores)

    # Pure-JAX reference of the original MF.forward semantics.
    item_embs = item_table[item_ids]            # [B, S, K, D]
    user_embs = user_table[user_ids]            # [B, S, D]
    ref = jnp.sum(item_embs * user_embs[:, :, None, :], axis=-1)

    assert scores.shape == (B, S, K)
    # Tolerance covers MXU f32 matmul precision modes for the one-hot gather;
    # any indexing/reduction bug would produce O(1e-1) errors.
    max_err = float(jnp.max(jnp.abs(scores - ref)))
    assert jnp.allclose(scores, ref, atol=1e-3, rtol=1e-3), max_err

    print("KERNEL_OK")
</pallas_src>

<mosaic_0001>
module attributes {stable_mosaic.version = 11 : i64} {
  func.func @_mf_fused_kernel(%arg0: i32, %arg1: memref<256x1xi32, #tpu.memory_space<vmem>>, %arg2: memref<256x1xi32, #tpu.memory_space<vmem>>, %arg3: memref<128x32xf32, #tpu.memory_space<vmem>>, %arg4: memref<128x32xf32, #tpu.memory_space<vmem>>, %arg5: memref<256x1xf32, #tpu.memory_space<vmem>>) attributes {dimension_semantics = [#tpu.dimension_semantics<parallel>], iteration_bounds = array<i64: 1>, scalar_prefetch = 0 : i64, scratch_operands = 0 : i64, tpu.core_type = #tpu.core_type<tc>, window_params = [{transform_indices = @transform_0, window_bounds = array<i64: 256, 1>}, {transform_indices = @transform_1, window_bounds = array<i64: 256, 1>}, {pipeline_mode = #tpu.pipeline_mode<synchronous>, transform_indices = @transform_2, window_bounds = array<i64: 128, 32>}, {pipeline_mode = #tpu.pipeline_mode<synchronous>, transform_indices = @transform_3, window_bounds = array<i64: 128, 32>}, {transform_indices = @transform_4, window_bounds = array<i64: 256, 1>}]} {
    %0 = tpu.iota {dimensions = array<i32: 1>} : vector<256x128xi32>
    %c0 = arith.constant 0 : index
    %c0_0 = arith.constant 0 : index
    %1 = vector.load %arg1[%c0, %c0_0] : memref<256x1xi32, #tpu.memory_space<vmem>>, vector<256x1xi32>
    %2 = vector.broadcast %1 : vector<256x1xi32> to vector<256x128xi32>
    %3 = arith.cmpi eq, %0, %2 : vector<256x128xi32>
    %4 = arith.extui %3 : vector<256x128xi1> to vector<256x128xi32>
    %5 = arith.sitofp %4 : vector<256x128xi32> to vector<256x128xf32>
    %c0_1 = arith.constant 0 : index
    %c0_2 = arith.constant 0 : index
    %6 = vector.load %arg3[%c0_1, %c0_2] : memref<128x32xf32, #tpu.memory_space<vmem>>, vector<128x32xf32>
    %cst = arith.constant dense<0.000000e+00> : vector<256x32xf32>
    %7 = tpu.matmul %5, %6, %cst {dimension_numbers = #tpu.dot_dimension_numbers<[1], [0], [0], [1], [0, 0, 1, 1], [], []>} : vector<256x128xf32>, vector<128x32xf32>, vector<256x32xf32> -> vector<256x32xf32>
    %8 = tpu.iota {dimensions = array<i32: 1>} : vector<256x128xi32>
    %c0_3 = arith.constant 0 : index
    %c0_4 = arith.constant 0 : index
    %9 = vector.load %arg2[%c0_3, %c0_4] : memref<256x1xi32, #tpu.memory_space<vmem>>, vector<256x1xi32>
    %10 = vector.broadcast %9 : vector<256x1xi32> to vector<256x128xi32>
    %11 = arith.cmpi eq, %8, %10 : vector<256x128xi32>
    %12 = arith.extui %11 : vector<256x128xi1> to vector<256x128xi32>
    %13 = arith.sitofp %12 : vector<256x128xi32> to vector<256x128xf32>
    %c0_5 = arith.constant 0 : index
    %c0_6 = arith.constant 0 : index
    %14 = vector.load %arg4[%c0_5, %c0_6] : memref<128x32xf32, #tpu.memory_space<vmem>>, vector<128x32xf32>
    %cst_7 = arith.constant dense<0.000000e+00> : vector<256x32xf32>
    %15 = tpu.matmul %13, %14, %cst_7 {dimension_numbers = #tpu.dot_dimension_numbers<[1], [0], [0], [1], [0, 0, 1, 1], [], []>} : vector<256x128xf32>, vector<128x32xf32>, vector<256x32xf32> -> vector<256x32xf32>
    %16 = arith.mulf %7, %15 : vector<256x32xf32>
    %cst_8 = arith.constant dense<0.000000e+00> : vector<256xf32>
    %17 = vector.multi_reduction <add>, %16, %cst_8 [1] : vector<256x32xf32> to vector<256xf32>
    %18 = vector.shape_cast %17 : vector<256xf32> to vector<256x1xf32>
    %c0_9 = arith.constant 0 : index
    %c0_10 = arith.constant 0 : index
    %19 = vector.load %arg5[%c0_9, %c0_10] : memref<256x1xf32, #tpu.memory_space<vmem>>, vector<256x1xf32>
    tpu.vector_store %arg5[%c0_9, %c0_10], %18 {strides = array<i32>} : memref<256x1xf32, #tpu.memory_space<vmem>>, vector<256x1xf32>,
    return
  }
  func.func @transform_0(%arg0: i32) -> (i32, i32) {
    %c0_i32 = arith.constant 0 : i32
    %c0_i32_0 = arith.constant 0 : i32
    return %arg0, %c0_i32 : i32, i32
  }
  func.func @transform_1(%arg0: i32) -> (i32, i32) {
    %c0_i32 = arith.constant 0 : i32
    %c0_i32_0 = arith.constant 0 : i32
    return %arg0, %c0_i32 : i32, i32
  }
  func.func @transform_2(%arg0: i32) -> (i32, i32) {
    %c0_i32 = arith.constant 0 : i32
    %c0_i32_0 = arith.constant 0 : i32
    %c0_i32_1 = arith.constant 0 : i32
    return %c0_i32, %c0_i32_0 : i32, i32
  }
  func.func @transform_3(%arg0: i32) -> (i32, i32) {
    %c0_i32 = arith.constant 0 : i32
    %c0_i32_0 = arith.constant 0 : i32
    %c0_i32_1 = arith.constant 0 : i32
    return %c0_i32, %c0_i32_0 : i32, i32
  }
  func.func @transform_4(%arg0: i32) -> (i32, i32) {
    %c0_i32 = arith.constant 0 : i32
    %c0_i32_0 = arith.constant 0 : i32
    return %arg0, %c0_i32 : i32, i32
  }
}

</mosaic_0001>

<llo_original>
// kernel: tpu_custom_call.1
$region0: #{tpu_custom_call.1}
  #allocation0 [shape = 'u32[]', space=smem, size = 0x4, offset = 0x4, fixed_abs, tag = 'smem constant byte address 0x4 - core index']
  #allocation1 [shape = 'u32[72,128]{1,0:T(1,128)}', space=vmem, size = 0x9000, scoped, tag = 'internal scratch']
  %s0 = inlined_call_operand.vmem [shape: s32[256,1], index: 0, kind: input, shape index: {}]
  %s1 = inlined_call_operand.vmem [shape: s32[256,1], index: 1, kind: input, shape index: {}]
  %s2 = inlined_call_operand.vmem [shape: f32[128,32], index: 2, kind: input, shape index: {}]
  %s3 = inlined_call_operand.vmem [shape: f32[128,32], index: 3, kind: input, shape index: {}]
  %s4 = inlined_call_operand.vmem [shape: f32[256,1], index: 4, kind: output, shape index: {}]
  %s5 = sld [smem:[#allocation0]]
  $region26: #{tpu_custom_call.1} parent=0
    _
  %s7 = ssub.s32 1, %s5
  %s8 = scalar_select 0, %s7, %s5
  // Predicated region
  $region2: #{tpu_custom_call.1} parent=0 // pred_check
    _
  $region3: #{tpu_custom_call.1} parent=0 // pred_check_branch
    %10 = sbr.rel (0) target = $region5
  $region4: #{tpu_custom_call.1} parent=0 // pred_region
    _
  $region5: #{tpu_custom_call.1} parent=0 // pred_fallthru
    _
  // Predicated region
  $region6: #{tpu_custom_call.1} parent=0 // pred_check
    _
  $region7: #{tpu_custom_call.1} parent=0 // pred_check_branch
    %12 = sbr.rel (0) target = $region9
  $region8: #{tpu_custom_call.1} parent=0 // pred_region
    _
  $region9: #{tpu_custom_call.1} parent=0 // pred_fallthru
    _
  // Predicated region
  $region10: #{tpu_custom_call.1} parent=0 // pred_check
    _
  $region11: #{tpu_custom_call.1} parent=0 // pred_check_branch
    %14 = sbr.rel (0) target = $region13
  $region12: #{tpu_custom_call.1} parent=0 // pred_region
    _
  $region13: #{tpu_custom_call.1} parent=0 // pred_fallthru
    _
  // Predicated region
  $region14: #{tpu_custom_call.1} parent=0 // pred_check
    _
  $region15: #{tpu_custom_call.1} parent=0 // pred_check_branch
    %16 = sbr.rel (0) target = $region17
  $region16: #{tpu_custom_call.1} parent=0 // pred_region
    _
  $region17: #{tpu_custom_call.1} parent=0 // pred_fallthru
    _
  %v17 = vlaneseq
  %v18 = vand.u32 %v17, 127
  %v19 = vld [vmem:[%s0] sm:$0xff]
  %v20 = vld [vmem:[%s0 + $0x8] sm:$0xff]
  %v21 = vld [vmem:[%s0 + $0x10] sm:$0xff]
  %v22 = vld [vmem:[%s0 + $0x18] sm:$0xff]
  %v23 = vld [vmem:[%s0 + $0x20] sm:$0xff]
  %v24 = vld [vmem:[%s0 + $0x28] sm:$0xff]
  %v25 = vld [vmem:[%s0 + $0x30] sm:$0xff]
  %v26 = vld [vmem:[%s0 + $0x38] sm:$0xff]
  %v27 = vld [vmem:[%s0 + $0x40] sm:$0xff]
  %v28 = vld [vmem:[%s0 + $0x48] sm:$0xff]
  %v29 = vld [vmem:[%s0 + $0x50] sm:$0xff]
  %v30 = vld [vmem:[%s0 + $0x58] sm:$0xff]
  %v31 = vld [vmem:[%s0 + $0x60] sm:$0xff]
  %v32 = vld [vmem:[%s0 + $0x68] sm:$0xff]
  %v33 = vld [vmem:[%s0 + $0x70] sm:$0xff]
  %v34 = vld [vmem:[%s0 + $0x78] sm:$0xff]
  %v35 = vld [vmem:[%s0 + $0x80] sm:$0xff]
  %v36 = vld [vmem:[%s0 + $0x88] sm:$0xff]
  %v37 = vld [vmem:[%s0 + $0x90] sm:$0xff]
  %v38 = vld [vmem:[%s0 + $0x98] sm:$0xff]
  %v39 = vld [vmem:[%s0 + $0xa0] sm:$0xff]
  %v40 = vld [vmem:[%s0 + $0xa8] sm:$0xff]
  %v41 = vld [vmem:[%s0 + $0xb0] sm:$0xff]
  %v42 = vld [vmem:[%s0 + $0xb8] sm:$0xff]
  %v43 = vld [vmem:[%s0 + $0xc0] sm:$0xff]
  %v44 = vld [vmem:[%s0 + $0xc8] sm:$0xff]
  %v45 = vld [vmem:[%s0 + $0xd0] sm:$0xff]
  %v46 = vld [vmem:[%s0 + $0xd8] sm:$0xff]
  %v47 = vld [vmem:[%s0 + $0xe0] sm:$0xff]
  %v48 = vld [vmem:[%s0 + $0xe8] sm:$0xff]
  %v49 = vld [vmem:[%s0 + $0xf0] sm:$0xff]
  %v50 = vld [vmem:[%s0 + $0xf8] sm:$0xff]
  %51 = vset.pattern.permute.xlu0 0
  %52 = vperm.xlu0 %51, %v19
  %v53 = vpop.permute.xlu0 %52
  %54 = vset.pattern.permute.xlu0 0
  %55 = vperm.xlu0 %54, %v20
  %v56 = vpop.permute.xlu0 %55
  %57 = vset.pattern.permute.xlu0 0
  %58 = vperm.xlu0 %57, %v21
  %v59 = vpop.permute.xlu0 %58
  %60 = vset.pattern.permute.xlu0 0
  %61 = vperm.xlu0 %60, %v22
  %v62 = vpop.permute.xlu0 %61
  %63 = vset.pattern.permute.xlu0 0
  %64 = vperm.xlu0 %63, %v23
  %v65 = vpop.permute.xlu0 %64
  %66 = vset.pattern.permute.xlu0 0
  %67 = vperm.xlu0 %66, %v24
  %v68 = vpop.permute.xlu0 %67
  %69 = vset.pattern.permute.xlu0 0
  %70 = vperm.xlu0 %69, %v25
  %v71 = vpop.permute.xlu0 %70
  %72 = vset.pattern.permute.xlu0 0
  %73 = vperm.xlu0 %72, %v26
  %v74 = vpop.permute.xlu0 %73
  %75 = vset.pattern.permute.xlu0 0
  %76 = vperm.xlu0 %75, %v27
  %v77 = vpop.permute.xlu0 %76
  %78 = vset.pattern.permute.xlu0 0
  %79 = vperm.xlu0 %78, %v28
  %v80 = vpop.permute.xlu0 %79
  %81 = vset.pattern.permute.xlu0 0
  %82 = vperm.xlu0 %81, %v29
  %v83 = vpop.permute.xlu0 %82
  %84 = vset.pattern.permute.xlu0 0
  %85 = vperm.xlu0 %84, %v30
  %v86 = vpop.permute.xlu0 %85
  %87 = vset.pattern.permute.xlu0 0
  %88 = vperm.xlu0 %87, %v31
  %v89 = vpop.permute.xlu0 %88
  %90 = vset.pattern.permute.xlu0 0
  %91 = vperm.xlu0 %90, %v32
  %v92 = vpop.permute.xlu0 %91
  %93 = vset.pattern.permute.xlu0 0
  %94 = vperm.xlu0 %93, %v33
  %v95 = vpop.permute.xlu0 %94
  %96 = vset.pattern.permute.xlu0 0
  %97 = vperm.xlu0 %96, %v34
  %v98 = vpop.permute.xlu0 %97
  %99 = vset.pattern.permute.xlu0 0
  %100 = vperm.xlu0 %99, %v35
  %v101 = vpop.permute.xlu0 %100
  %102 = vset.pattern.permute.xlu0 0
  %103 = vperm.xlu0 %102, %v36
  %v104 = vpop.permute.xlu0 %103
  %105 = vset.pattern.permute.xlu0 0
  %106 = vperm.xlu0 %105, %v37
  %v107 = vpop.permute.xlu0 %106
  %108 = vset.pattern.permute.xlu0 0
  %109 = vperm.xlu0 %108, %v38
  %v110 = vpop.permute.xlu0 %109
  %111 = vset.pattern.permute.xlu0 0
  %112 = vperm.xlu0 %111, %v39
  %v113 = vpop.permute.xlu0 %112
  %114 = vset.pattern.permute.xlu0 0
  %115 = vperm.xlu0 %114, %v40
  %v116 = vpop.permute.xlu0 %115
  %117 = vset.pattern.permute.xlu0 0
  %118 = vperm.xlu0 %117, %v41
  %v119 = vpop.permute.xlu0 %118
  %120 = vset.pattern.permute.xlu0 0
  %121 = vperm.xlu0 %120, %v42
  %v122 = vpop.permute.xlu0 %121
  %123 = vset.pattern.permute.xlu0 0
  %124 = vperm.xlu0 %123, %v43
  %v125 = vpop.permute.xlu0 %124
  %126 = vset.pattern.permute.xlu0 0
  %127 = vperm.xlu0 %126, %v44
  %v128 = vpop.permute.xlu0 %127
  %129 = vset.pattern.permute.xlu0 0
  %130 = vperm.xlu0 %129, %v45
  %v131 = vpop.permute.xlu0 %130
  %132 = vset.pattern.permute.xlu0 0
  %133 = vperm.xlu0 %132, %v46
  %v134 = vpop.permute.xlu0 %133
  %135 = vset.pattern.permute.xlu0 0
  %136 = vperm.xlu0 %135, %v47
  %v137 = vpop.permute.xlu0 %136
  %138 = vset.pattern.permute.xlu0 0
  %139 = vperm.xlu0 %138, %v48
  %v140 = vpop.permute.xlu0 %139
  %141 = vset.pattern.permute.xlu0 0
  %142 = vperm.xlu0 %141, %v49
  %v143 = vpop.permute.xlu0 %142
  %144 = vset.pattern.permute.xlu0 0
  %145 = vperm.xlu0 %144, %v50
  %v146 = vpop.permute.xlu0 %145
  %vm147 = vcmp.eq.s32.totalorder %v18, %v53
  %vm148 = vcmp.eq.s32.totalorder %v18, %v56
  %vm149 = vcmp.eq.s32.totalorder %v18, %v59
  %vm150 = vcmp.eq.s32.totalorder %v18, %v62
  %vm151 = vcmp.eq.s32.totalorder %v18, %v65
  %vm152 = vcmp.eq.s32.totalorder %v18, %v68
  %vm153 = vcmp.eq.s32.totalorder %v18, %v71
  %vm154 = vcmp.eq.s32.totalorder %v18, %v74
  %vm155 = vcmp.eq.s32.totalorder %v18, %v77
  %vm156 = vcmp.eq.s32.totalorder %v18, %v80
  %vm157 = vcmp.eq.s32.totalorder %v18, %v83
  %vm158 = vcmp.eq.s32.totalorder %v18, %v86
  %vm159 = vcmp.eq.s32.totalorder %v18, %v89
  %vm160 = vcmp.eq.s32.totalorder %v18, %v92
  %vm161 = vcmp.eq.s32.totalorder %v18, %v95
  %vm162 = vcmp.eq.s32.totalorder %v18, %v98
  %vm163 = vcmp.eq.s32.totalorder %v18, %v101
  %vm164 = vcmp.eq.s32.totalorder %v18, %v104
  %vm165 = vcmp.eq.s32.totalorder %v18, %v107
  %vm166 = vcmp.eq.s32.totalorder %v18, %v110
  %vm167 = vcmp.eq.s32.totalorder %v18, %v113
  %vm168 = vcmp.eq.s32.totalorder %v18, %v116
  %vm169 = vcmp.eq.s32.totalorder %v18, %v119
  %vm170 = vcmp.eq.s32.totalorder %v18, %v122
  %vm171 = vcmp.eq.s32.totalorder %v18, %v125
  %vm172 = vcmp.eq.s32.totalorder %v18, %v128
  %vm173 = vcmp.eq.s32.totalorder %v18, %v131
  %vm174 = vcmp.eq.s32.totalorder %v18, %v134
  %vm175 = vcmp.eq.s32.totalorder %v18, %v137
  %vm176 = vcmp.eq.s32.totalorder %v18, %v140
  %vm177 = vcmp.eq.s32.totalorder %v18, %v143
  %vm178 = vcmp.eq.s32.totalorder %v18, %v146
  %v179 = vsel %vm147, 1, 0
  %v180 = vsel %vm148, 1, 0
  %v181 = vsel %vm149, 1, 0
  %v182 = vsel %vm150, 1, 0
  %v183 = vsel %vm151, 1, 0
  %v184 = vsel %vm152, 1, 0
  %v185 = vsel %vm153, 1, 0
  %v186 = vsel %vm154, 1, 0
  %v187 = vsel %vm155, 1, 0
  %v188 = vsel %vm156, 1, 0
  %v189 = vsel %vm157, 1, 0
  %v190 = vsel %vm158, 1, 0
  %v191 = vsel %vm159, 1, 0
  %v192 = vsel %vm160, 1, 0
  %v193 = vsel %vm161, 1, 0
  %v194 = vsel %vm162, 1, 0
  %v195 = vsel %vm163, 1, 0
  %v196 = vsel %vm164, 1, 0
  %v197 = vsel %vm165, 1, 0
  %v198 = vsel %vm166, 1, 0
  %v199 = vsel %vm167, 1, 0
  %v200 = vsel %vm168, 1, 0
  %v201 = vsel %vm169, 1, 0
  %v202 = vsel %vm170, 1, 0
  %v203 = vsel %vm171, 1, 0
  %v204 = vsel %vm172, 1, 0
  %v205 = vsel %vm173, 1, 0
  %v206 = vsel %vm174, 1, 0
  %v207 = vsel %vm175, 1, 0
  %v208 = vsel %vm176, 1, 0
  %v209 = vsel %vm177, 1, 0
  %v210 = vsel %vm178, 1, 0
  %v211 = vcvt.s32.f32 %v179
  %v212 = vcvt.s32.f32 %v180
  %v213 = vcvt.s32.f32 %v181
  %v214 = vcvt.s32.f32 %v182
  %v215 = vcvt.s32.f32 %v183
  %v216 = vcvt.s32.f32 %v184
  %v217 = vcvt.s32.f32 %v185
  %v218 = vcvt.s32.f32 %v186
  %v219 = vcvt.s32.f32 %v187
  %v220 = vcvt.s32.f32 %v188
  %v221 = vcvt.s32.f32 %v189
  %v222 = vcvt.s32.f32 %v190
  %v223 = vcvt.s32.f32 %v191
  %v224 = vcvt.s32.f32 %v192
  %v225 = vcvt.s32.f32 %v193
  %v226 = vcvt.s32.f32 %v194
  %v227 = vcvt.s32.f32 %v195
  %v228 = vcvt.s32.f32 %v196
  %v229 = vcvt.s32.f32 %v197
  %v230 = vcvt.s32.f32 %v198
  %v231 = vcvt.s32.f32 %v199
  %v232 = vcvt.s32.f32 %v200
  %v233 = vcvt.s32.f32 %v201
  %v234 = vcvt.s32.f32 %v202
  %v235 = vcvt.s32.f32 %v203
  %v236 = vcvt.s32.f32 %v204
  %v237 = vcvt.s32.f32 %v205
  %v238 = vcvt.s32.f32 %v206
  %v239 = vcvt.s32.f32 %v207
  %v240 = vcvt.s32.f32 %v208
  %v241 = vcvt.s32.f32 %v209
  %v242 = vcvt.s32.f32 %v210
  %v243 = vld [vmem:[%s2] sm:$0xff]
  %v244 = vld [vmem:[%s2 + $0x8] sm:$0xff]
  %v245 = vld [vmem:[%s2 + $0x10] sm:$0xff]
  %v246 = vld [vmem:[%s2 + $0x18] sm:$0xff]
  %v247 = vld [vmem:[%s2 + $0x20] sm:$0xff]
  %v248 = vld [vmem:[%s2 + $0x28] sm:$0xff]
  %v249 = vld [vmem:[%s2 + $0x30] sm:$0xff]
  %v250 = vld [vmem:[%s2 + $0x38] sm:$0xff]
  %v251 = vld [vmem:[%s2 + $0x40] sm:$0xff]
  %v252 = vld [vmem:[%s2 + $0x48] sm:$0xff]
  %v253 = vld [vmem:[%s2 + $0x50] sm:$0xff]
  %v254 = vld [vmem:[%s2 + $0x58] sm:$0xff]
  %v255 = vld [vmem:[%s2 + $0x60] sm:$0xff]
  %v256 = vld [vmem:[%s2 + $0x68] sm:$0xff]
  %v257 = vld [vmem:[%s2 + $0x70] sm:$0xff]
  %v258 = vld [vmem:[%s2 + $0x78] sm:$0xff]
  %259 = vmatpush.msra.mxu0 %v258
  %260 = vmatpush.msra.mxu0 %v257
  %261 = vmatpush.msra.mxu0 %v256
  %262 = vmatpush.msra.mxu0 %v255
  %263 = vmatpush.msra.mxu0 %v254
  %264 = vmatpush.msra.mxu0 %v253
  %265 = vmatpush.msra.mxu0 %v252
  %266 = vmatpush.msra.mxu0 %v251
  %267 = vmatpush.msra.mxu0 %v250
  %268 = vmatpush.msra.mxu0 %v249
  %269 = vmatpush.msra.mxu0 %v248
  %270 = vmatpush.msra.mxu0 %v247
  %271 = vmatpush.msra.mxu0 %v246
  %272 = vmatpush.msra.mxu0 %v245
  %273 = vmatpush.msra.mxu0 %v244
  %274 = vmatpush.msra.mxu0 %v243
  %275 = vmatmul.f32.gmra.mxu0 %v211
  %v276 = vpop.f32.mrf.mxu0
  %v277 = vadd.f32 0.0, %v276
  %278 = vmatmul.f32.gmra.mxu0 %v212
  %v279 = vpop.f32.mrf.mxu0
  %v280 = vadd.f32 0.0, %v279
  %281 = vmatmul.f32.gmra.mxu0 %v213
  %v282 = vpop.f32.mrf.mxu0
  %v283 = vadd.f32 0.0, %v282
  %284 = vmatmul.f32.gmra.mxu0 %v214
  %v285 = vpop.f32.mrf.mxu0
  %v286 = vadd.f32 0.0, %v285
  %287 = vmatmul.f32.gmra.mxu0 %v215
  %v288 = vpop.f32.mrf.mxu0
  %v289 = vadd.f32 0.0, %v288
  %290 = vmatmul.f32.gmra.mxu0 %v216
  %v291 = vpop.f32.mrf.mxu0
  %v292 = vadd.f32 0.0, %v291
  %293 = vmatmul.f32.gmra.mxu0 %v217
  %v294 = vpop.f32.mrf.mxu0
  %v295 = vadd.f32 0.0, %v294
  %296 = vmatmul.f32.gmra.mxu0 %v218
  %v297 = vpop.f32.mrf.mxu0
  %v298 = vadd.f32 0.0, %v297
  %299 = vmatmul.f32.gmra.mxu0 %v219
  %v300 = vpop.f32.mrf.mxu0
  %v301 = vadd.f32 0.0, %v300
  %302 = vmatmul.f32.gmra.mxu0 %v220
  %v303 = vpop.f32.mrf.mxu0
  %v304 = vadd.f32 0.0, %v303
  %305 = vmatmul.f32.gmra.mxu0 %v221
  %v306 = vpop.f32.mrf.mxu0
  %v307 = vadd.f32 0.0, %v306
  %308 = vmatmul.f32.gmra.mxu0 %v222
  %v309 = vpop.f32.mrf.mxu0
  %v310 = vadd.f32 0.0, %v309
  %311 = vmatmul.f32.gmra.mxu0 %v223
  %v312 = vpop.f32.mrf.mxu0
  %v313 = vadd.f32 0.0, %v312
  %314 = vmatmul.f32.gmra.mxu0 %v224
  %v315 = vpop.f32.mrf.mxu0
  %v316 = vadd.f32 0.0, %v315
  %317 = vmatmul.f32.gmra.mxu0 %v225
  %v318 = vpop.f32.mrf.mxu0
  %v319 = vadd.f32 0.0, %v318
  %320 = vmatmul.f32.gmra.mxu0 %v226
  %v321 = vpop.f32.mrf.mxu0
  %v322 = vadd.f32 0.0, %v321
  %323 = vmatmul.f32.gmra.mxu0 %v227
  %v324 = vpop.f32.mrf.mxu0
  %v325 = vadd.f32 0.0, %v324
  %326 = vmatmul.f32.gmra.mxu0 %v228
  %v327 = vpop.f32.mrf.mxu0
  %v328 = vadd.f32 0.0, %v327
  %329 = vmatmul.f32.gmra.mxu0 %v229
  %v330 = vpop.f32.mrf.mxu0
  %v331 = vadd.f32 0.0, %v330
  %332 = vmatmul.f32.gmra.mxu0 %v230
  %v333 = vpop.f32.mrf.mxu0
  %v334 = vadd.f32 0.0, %v333
  %335 = vmatmul.f32.gmra.mxu0 %v231
  %v336 = vpop.f32.mrf.mxu0
  %v337 = vadd.f32 0.0, %v336
  %338 = vmatmul.f32.gmra.mxu0 %v232
  %v339 = vpop.f32.mrf.mxu0
  %v340 = vadd.f32 0.0, %v339
  %341 = vmatmul.f32.gmra.mxu0 %v233
  %v342 = vpop.f32.mrf.mxu0
  %v343 = vadd.f32 0.0, %v342
  %344 = vmatmul.f32.gmra.mxu0 %v234
  %v345 = vpop.f32.mrf.mxu0
  %v346 = vadd.f32 0.0, %v345
  %347 = vmatmul.f32.gmra.mxu0 %v235
  %v348 = vpop.f32.mrf.mxu0
  %v349 = vadd.f32 0.0, %v348
  %350 = vmatmul.f32.gmra.mxu0 %v236
  %v351 = vpop.f32.mrf.mxu0
  %v352 = vadd.f32 0.0, %v351
  %353 = vmatmul.f32.gmra.mxu0 %v237
  %v354 = vpop.f32.mrf.mxu0
  %v355 = vadd.f32 0.0, %v354
  %356 = vmatmul.f32.gmra.mxu0 %v238
  %v357 = vpop.f32.mrf.mxu0
  %v358 = vadd.f32 0.0, %v357
  %359 = vmatmul.f32.gmra.mxu0 %v239
  %v360 = vpop.f32.mrf.mxu0
  %v361 = vadd.f32 0.0, %v360
  %362 = vmatmul.f32.gmra.mxu0 %v240
  %v363 = vpop.f32.mrf.mxu0
  %v364 = vadd.f32 0.0, %v363
  %365 = vmatmul.f32.gmra.mxu0 %v241
  %v366 = vpop.f32.mrf.mxu0
  %v367 = vadd.f32 0.0, %v366
  %368 = vmatmul.f32.gmra.mxu0 %v242
  %v369 = vpop.f32.mrf.mxu0
  %v370 = vadd.f32 0.0, %v369
  %371 = vdwg.mxu0
  %v372 = vld [vmem:[%s1] sm:$0xff]
  %v373 = vld [vmem:[%s1 + $0x8] sm:$0xff]
  %v374 = vld [vmem:[%s1 + $0x10] sm:$0xff]
  %v375 = vld [vmem:[%s1 + $0x18] sm:$0xff]
  %v376 = vld [vmem:[%s1 + $0x20] sm:$0xff]
  %v377 = vld [vmem:[%s1 + $0x28] sm:$0xff]
  %v378 = vld [vmem:[%s1 + $0x30] sm:$0xff]
  %v379 = vld [vmem:[%s1 + $0x38] sm:$0xff]
  %v380 = vld [vmem:[%s1 + $0x40] sm:$0xff]
  %v381 = vld [vmem:[%s1 + $0x48] sm:$0xff]
  %v382 = vld [vmem:[%s1 + $0x50] sm:$0xff]
  %v383 = vld [vmem:[%s1 + $0x58] sm:$0xff]
  %v384 = vld [vmem:[%s1 + $0x60] sm:$0xff]
  %v385 = vld [vmem:[%s1 + $0x68] sm:$0xff]
  %v386 = vld [vmem:[%s1 + $0x70] sm:$0xff]
  %v387 = vld [vmem:[%s1 + $0x78] sm:$0xff]
  %v388 = vld [vmem:[%s1 + $0x80] sm:$0xff]
  %v389 = vld [vmem:[%s1 + $0x88] sm:$0xff]
  %v390 = vld [vmem:[%s1 + $0x90] sm:$0xff]
  %v391 = vld [vmem:[%s1 + $0x98] sm:$0xff]
  %v392 = vld [vmem:[%s1 + $0xa0] sm:$0xff]
  %v393 = vld [vmem:[%s1 + $0xa8] sm:$0xff]
  %v394 = vld [vmem:[%s1 + $0xb0] sm:$0xff]
  %v395 = vld [vmem:[%s1 + $0xb8] sm:$0xff]
  %v396 = vld [vmem:[%s1 + $0xc0] sm:$0xff]
  %v397 = vld [vmem:[%s1 + $0xc8] sm:$0xff]
  %v398 = vld [vmem:[%s1 + $0xd0] sm:$0xff]
  %v399 = vld [vmem:[%s1 + $0xd8] sm:$0xff]
  %v400 = vld [vmem:[%s1 + $0xe0] sm:$0xff]
  %v401 = vld [vmem:[%s1 + $0xe8] sm:$0xff]
  %v402 = vld [vmem:[%s1 + $0xf0] sm:$0xff]
  %v403 = vld [vmem:[%s1 + $0xf8] sm:$0xff]
  %404 = vset.pattern.permute.xlu0 0
  %405 = vperm.xlu0 %404, %v372
  %v406 = vpop.permute.xlu0 %405
  %407 = vset.pattern.permute.xlu0 0
  %408 = vperm.xlu0 %407, %v373
  %v409 = vpop.permute.xlu0 %408
  %410 = vset.pattern.permute.xlu0 0
  %411 = vperm.xlu0 %410, %v374
  %v412 = vpop.permute.xlu0 %411
  %413 = vset.pattern.permute.xlu0 0
  %414 = vperm.xlu0 %413, %v375
  %v415 = vpop.permute.xlu0 %414
  %416 = vset.pattern.permute.xlu0 0
  %417 = vperm.xlu0 %416, %v376
  %v418 = vpop.permute.xlu0 %417
  %419 = vset.pattern.permute.xlu0 0
  %420 = vperm.xlu0 %419, %v377
  %v421 = vpop.permute.xlu0 %420
  %422 = vset.pattern.permute.xlu0 0
  %423 = vperm.xlu0 %422, %v378
  %v424 = vpop.permute.xlu0 %423
  %425 = vset.pattern.permute.xlu0 0
  %426 = vperm.xlu0 %425, %v379
  %v427 = vpop.permute.xlu0 %426
  %428 = vset.pattern.permute.xlu0 0
  %429 = vperm.xlu0 %428, %v380
  %v430 = vpop.permute.xlu0 %429
  %431 = vset.pattern.permute.xlu0 0
  %432 = vperm.xlu0 %431, %v381
  %v433 = vpop.permute.xlu0 %432
  %434 = vset.pattern.permute.xlu0 0
  %435 = vperm.xlu0 %434, %v382
  %v436 = vpop.permute.xlu0 %435
  %437 = vset.pattern.permute.xlu0 0
  %438 = vperm.xlu0 %437, %v383
  %v439 = vpop.permute.xlu0 %438
  %440 = vset.pattern.permute.xlu0 0
  %441 = vperm.xlu0 %440, %v384
  %v442 = vpop.permute.xlu0 %441
  %443 = vset.pattern.permute.xlu0 0
  %444 = vperm.xlu0 %443, %v385
  %v445 = vpop.permute.xlu0 %444
  %446 = vset.pattern.permute.xlu0 0
  %447 = vperm.xlu0 %446, %v386
  %v448 = vpop.permute.xlu0 %447
  %449 = vset.pattern.permute.xlu0 0
  %450 = vperm.xlu0 %449, %v387
  %v451 = vpop.permute.xlu0 %450
  %452 = vset.pattern.permute.xlu0 0
  %453 = vperm.xlu0 %452, %v388
  %v454 = vpop.permute.xlu0 %453
  %455 = vset.pattern.permute.xlu0 0
  %456 = vperm.xlu0 %455, %v389
  %v457 = vpop.permute.xlu0 %456
  %458 = vset.pattern.permute.xlu0 0
  %459 = vperm.xlu0 %458, %v390
  %v460 = vpop.permute.xlu0 %459
  %461 = vset.pattern.permute.xlu0 0
  %462 = vperm.xlu0 %461, %v391
  %v463 = vpop.permute.xlu0 %462
  %464 = vset.pattern.permute.xlu0 0
  %465 = vperm.xlu0 %464, %v392
  %v466 = vpop.permute.xlu0 %465
  %467 = vset.pattern.permute.xlu0 0
  %468 = vperm.xlu0 %467, %v393
  %v469 = vpop.permute.xlu0 %468
  %470 = vset.pattern.permute.xlu0 0
  %471 = vperm.xlu0 %470, %v394
  %v472 = vpop.permute.xlu0 %471
  %473 = vset.pattern.permute.xlu0 0
  %474 = vperm.xlu0 %473, %v395
  %v475 = vpop.permute.xlu0 %474
  %476 = vset.pattern.permute.xlu0 0
  %477 = vperm.xlu0 %476, %v396
  %v478 = vpop.permute.xlu0 %477
  %479 = vset.pattern.permute.xlu0 0
  %480 = vperm.xlu0 %479, %v397
  %v481 = vpop.permute.xlu0 %480
  %482 = vset.pattern.permute.xlu0 0
  %483 = vperm.xlu0 %482, %v398
  %v484 = vpop.permute.xlu0 %483
  %485 = vset.pattern.permute.xlu0 0
  %486 = vperm.xlu0 %485, %v399
  %v487 = vpop.permute.xlu0 %486
  %488 = vset.pattern.permute.xlu0 0
  %489 = vperm.xlu0 %488, %v400
  %v490 = vpop.permute.xlu0 %489
  %491 = vset.pattern.permute.xlu0 0
  %492 = vperm.xlu0 %491, %v401
  %v493 = vpop.permute.xlu0 %492
  %494 = vset.pattern.permute.xlu0 0
  %495 = vperm.xlu0 %494, %v402
  %v496 = vpop.permute.xlu0 %495
  %497 = vset.pattern.permute.xlu0 0
  %498 = vperm.xlu0 %497, %v403
  %v499 = vpop.permute.xlu0 %498
  %vm500 = vcmp.eq.s32.totalorder %v18, %v406
  %vm501 = vcmp.eq.s32.totalorder %v18, %v409
  %vm502 = vcmp.eq.s32.totalorder %v18, %v412
  %vm503 = vcmp.eq.s32.totalorder %v18, %v415
  %vm504 = vcmp.eq.s32.totalorder %v18, %v418
  %vm505 = vcmp.eq.s32.totalorder %v18, %v421
  %vm506 = vcmp.eq.s32.totalorder %v18, %v424
  %vm507 = vcmp.eq.s32.totalorder %v18, %v427
  %vm508 = vcmp.eq.s32.totalorder %v18, %v430
  %vm509 = vcmp.eq.s32.totalorder %v18, %v433
  %vm510 = vcmp.eq.s32.totalorder %v18, %v436
  %vm511 = vcmp.eq.s32.totalorder %v18, %v439
  %vm512 = vcmp.eq.s32.totalorder %v18, %v442
  %vm513 = vcmp.eq.s32.totalorder %v18, %v445
  %vm514 = vcmp.eq.s32.totalorder %v18, %v448
  %vm515 = vcmp.eq.s32.totalorder %v18, %v451
  %vm516 = vcmp.eq.s32.totalorder %v18, %v454
  %vm517 = vcmp.eq.s32.totalorder %v18, %v457
  %vm518 = vcmp.eq.s32.totalorder %v18, %v460
  %vm519 = vcmp.eq.s32.totalorder %v18, %v463
  %vm520 = vcmp.eq.s32.totalorder %v18, %v466
  %vm521 = vcmp.eq.s32.totalorder %v18, %v469
  %vm522 = vcmp.eq.s32.totalorder %v18, %v472
  %vm523 = vcmp.eq.s32.totalorder %v18, %v475
  %vm524 = vcmp.eq.s32.totalorder %v18, %v478
  %vm525 = vcmp.eq.s32.totalorder %v18, %v481
  %vm526 = vcmp.eq.s32.totalorder %v18, %v484
  %vm527 = vcmp.eq.s32.totalorder %v18, %v487
  %vm528 = vcmp.eq.s32.totalorder %v18, %v490
  %vm529 = vcmp.eq.s32.totalorder %v18, %v493
  %vm530 = vcmp.eq.s32.totalorder %v18, %v496
  %vm531 = vcmp.eq.s32.totalorder %v18, %v499
  %v532 = vsel %vm500, 1, 0
  %v533 = vsel %vm501, 1, 0
  %v534 = vsel %vm502, 1, 0
  %v535 = vsel %vm503, 1, 0
  %v536 = vsel %vm504, 1, 0
  %v537 = vsel %vm505, 1, 0
  %v538 = vsel %vm506, 1, 0
  %v539 = vsel %vm507, 1, 0
  %v540 = vsel %vm508, 1, 0
  %v541 = vsel %vm509, 1, 0
  %v542 = vsel %vm510, 1, 0
  %v543 = vsel %vm511, 1, 0
  %v544 = vsel %vm512, 1, 0
  %v545 = vsel %vm513, 1, 0
  %v546 = vsel %vm514, 1, 0
  %v547 = vsel %vm515, 1, 0
  %v548 = vsel %vm516, 1, 0
  %v549 = vsel %vm517, 1, 0
  %v550 = vsel %vm518, 1, 0
  %v551 = vsel %vm519, 1, 0
  %v552 = vsel %vm520, 1, 0
  %v553 = vsel %vm521, 1, 0
  %v554 = vsel %vm522, 1, 0
  %v555 = vsel %vm523, 1, 0
  %v556 = vsel %vm524, 1, 0
  %v557 = vsel %vm525, 1, 0
  %v558 = vsel %vm526, 1, 0
  %v559 = vsel %vm527, 1, 0
  %v560 = vsel %vm528, 1, 0
  %v561 = vsel %vm529, 1, 0
  %v562 = vsel %vm530, 1, 0
  %v563 = vsel %vm531, 1, 0
  %v564 = vcvt.s32.f32 %v532
  %v565 = vcvt.s32.f32 %v533
  %v566 = vcvt.s32.f32 %v534
  %v567 = vcvt.s32.f32 %v535
  %v568 = vcvt.s32.f32 %v536
  %v569 = vcvt.s32.f32 %v537
  %v570 = vcvt.s32.f32 %v538
  %v571 = vcvt.s32.f32 %v539
  %v572 = vcvt.s32.f32 %v540
  %v573 = vcvt.s32.f32 %v541
  %v574 = vcvt.s32.f32 %v542
  %v575 = vcvt.s32.f32 %v543
  %v576 = vcvt.s32.f32 %v544
  %v577 = vcvt.s32.f32 %v545
  %v578 = vcvt.s32.f32 %v546
  %v579 = vcvt.s32.f32 %v547
  %v580 = vcvt.s32.f32 %v548
  %v581 = vcvt.s32.f32 %v549
  %v582 = vcvt.s32.f32 %v550
  %v583 = vcvt.s32.f32 %v551
  %v584 = vcvt.s32.f32 %v552
  %v585 = vcvt.s32.f32 %v553
  %v586 = vcvt.s32.f32 %v554
  %v587 = vcvt.s32.f32 %v555
  %v588 = vcvt.s32.f32 %v556
  %v589 = vcvt.s32.f32 %v557
  %v590 = vcvt.s32.f32 %v558
  %v591 = vcvt.s32.f32 %v559
  %v592 = vcvt.s32.f32 %v560
  %v593 = vcvt.s32.f32 %v561
  %v594 = vcvt.s32.f32 %v562
  %v595 = vcvt.s32.f32 %v563
  %v596 = vld [vmem:[%s3] sm:$0xff]
  %v597 = vld [vmem:[%s3 + $0x8] sm:$0xff]
  %v598 = vld [vmem:[%s3 + $0x10] sm:$0xff]
  %v599 = vld [vmem:[%s3 + $0x18] sm:$0xff]
  %v600 = vld [vmem:[%s3 + $0x20] sm:$0xff]
  %v601 = vld [vmem:[%s3 + $0x28] sm:$0xff]
  %v602 = vld [vmem:[%s3 + $0x30] sm:$0xff]
  %v603 = vld [vmem:[%s3 + $0x38] sm:$0xff]
  %v604 = vld [vmem:[%s3 + $0x40] sm:$0xff]
  %v605 = vld [vmem:[%s3 + $0x48] sm:$0xff]
  %v606 = vld [vmem:[%s3 + $0x50] sm:$0xff]
  %v607 = vld [vmem:[%s3 + $0x58] sm:$0xff]
  %v608 = vld [vmem:[%s3 + $0x60] sm:$0xff]
  %v609 = vld [vmem:[%s3 + $0x68] sm:$0xff]
  %v610 = vld [vmem:[%s3 + $0x70] sm:$0xff]
  %v611 = vld [vmem:[%s3 + $0x78] sm:$0xff]
  %612 = vmatpush.msra.mxu0 %v611
  %613 = vmatpush.msra.mxu0 %v610
  %614 = vmatpush.msra.mxu0 %v609
  %615 = vmatpush.msra.mxu0 %v608
  %616 = vmatpush.msra.mxu0 %v607
  %617 = vmatpush.msra.mxu0 %v606
  %618 = vmatpush.msra.mxu0 %v605
  %619 = vmatpush.msra.mxu0 %v604
  %620 = vmatpush.msra.mxu0 %v603
  %621 = vmatpush.msra.mxu0 %v602
  %622 = vmatpush.msra.mxu0 %v601
  %623 = vmatpush.msra.mxu0 %v600
  %624 = vmatpush.msra.mxu0 %v599
  %625 = vmatpush.msra.mxu0 %v598
  %626 = vmatpush.msra.mxu0 %v597
  %627 = vmatpush.msra.mxu0 %v596
  %628 = vmatmul.f32.gmra.mxu0 %v564
  %v629 = vpop.f32.mrf.mxu0
  %v630 = vadd.f32 0.0, %v629
  %631 = vmatmul.f32.gmra.mxu0 %v565
  %v632 = vpop.f32.mrf.mxu0
  %v633 = vadd.f32 0.0, %v632
  %634 = vmatmul.f32.gmra.mxu0 %v566
  %v635 = vpop.f32.mrf.mxu0
  %v636 = vadd.f32 0.0, %v635
  %637 = vmatmul.f32.gmra.mxu0 %v567
  %v638 = vpop.f32.mrf.mxu0
  %v639 = vadd.f32 0.0, %v638
  %640 = vmatmul.f32.gmra.mxu0 %v568
  %v641 = vpop.f32.mrf.mxu0
  %v642 = vadd.f32 0.0, %v641
  %643 = vmatmul.f32.gmra.mxu0 %v569
  %v644 = vpop.f32.mrf.mxu0
  %v645 = vadd.f32 0.0, %v644
  %646 = vmatmul.f32.gmra.mxu0 %v570
  %v647 = vpop.f32.mrf.mxu0
  %v648 = vadd.f32 0.0, %v647
  %649 = vmatmul.f32.gmra.mxu0 %v571
  %v650 = vpop.f32.mrf.mxu0
  %v651 = vadd.f32 0.0, %v650
  %652 = vmatmul.f32.gmra.mxu0 %v572
  %v653 = vpop.f32.mrf.mxu0
  %v654 = vadd.f32 0.0, %v653
  %655 = vmatmul.f32.gmra.mxu0 %v573
  %v656 = vpop.f32.mrf.mxu0
  %v657 = vadd.f32 0.0, %v656
  %658 = vmatmul.f32.gmra.mxu0 %v574
  %v659 = vpop.f32.mrf.mxu0
  %v660 = vadd.f32 0.0, %v659
  %661 = vmatmul.f32.gmra.mxu0 %v575
  %v662 = vpop.f32.mrf.mxu0
  %v663 = vadd.f32 0.0, %v662
  %664 = vmatmul.f32.gmra.mxu0 %v576
  %v665 = vpop.f32.mrf.mxu0
  %v666 = vadd.f32 0.0, %v665
  %667 = vmatmul.f32.gmra.mxu0 %v577
  %v668 = vpop.f32.mrf.mxu0
  %v669 = vadd.f32 0.0, %v668
  %670 = vmatmul.f32.gmra.mxu0 %v578
  %v671 = vpop.f32.mrf.mxu0
  %v672 = vadd.f32 0.0, %v671
  %673 = vmatmul.f32.gmra.mxu0 %v579
  %v674 = vpop.f32.mrf.mxu0
  %v675 = vadd.f32 0.0, %v674
  %676 = vmatmul.f32.gmra.mxu0 %v580
  %v677 = vpop.f32.mrf.mxu0
  %v678 = vadd.f32 0.0, %v677
  %679 = vmatmul.f32.gmra.mxu0 %v581
  %v680 = vpop.f32.mrf.mxu0
  %v681 = vadd.f32 0.0, %v680
  %682 = vmatmul.f32.gmra.mxu0 %v582
  %v683 = vpop.f32.mrf.mxu0
  %v684 = vadd.f32 0.0, %v683
  %685 = vmatmul.f32.gmra.mxu0 %v583
  %v686 = vpop.f32.mrf.mxu0
  %v687 = vadd.f32 0.0, %v686
  %688 = vmatmul.f32.gmra.mxu0 %v584
  %v689 = vpop.f32.mrf.mxu0
  %v690 = vadd.f32 0.0, %v689
  %691 = vmatmul.f32.gmra.mxu0 %v585
  %v692 = vpop.f32.mrf.mxu0
  %v693 = vadd.f32 0.0, %v692
  %694 = vmatmul.f32.gmra.mxu0 %v586
  %v695 = vpop.f32.mrf.mxu0
  %v696 = vadd.f32 0.0, %v695
  %697 = vmatmul.f32.gmra.mxu0 %v587
  %v698 = vpop.f32.mrf.mxu0
  %v699 = vadd.f32 0.0, %v698
  %700 = vmatmul.f32.gmra.mxu0 %v588
  %v701 = vpop.f32.mrf.mxu0
  %v702 = vadd.f32 0.0, %v701
  %703 = vmatmul.f32.gmra.mxu0 %v589
  %v704 = vpop.f32.mrf.mxu0
  %v705 = vadd.f32 0.0, %v704
  %706 = vmatmul.f32.gmra.mxu0 %v590
  %v707 = vpop.f32.mrf.mxu0
  %v708 = vadd.f32 0.0, %v707
  %709 = vmatmul.f32.gmra.mxu0 %v591
  %v710 = vpop.f32.mrf.mxu0
  %v711 = vadd.f32 0.0, %v710
  %712 = vmatmul.f32.gmra.mxu0 %v592
  %v713 = vpop.f32.mrf.mxu0
  %v714 = vadd.f32 0.0, %v713
  %715 = vmatmul.f32.gmra.mxu0 %v593
  %v716 = vpop.f32.mrf.mxu0
  %v717 = vadd.f32 0.0, %v716
  %718 = vmatmul.f32.gmra.mxu0 %v594
  %v719 = vpop.f32.mrf.mxu0
  %v720 = vadd.f32 0.0, %v719
  %721 = vmatmul.f32.gmra.mxu0 %v595
  %v722 = vpop.f32.mrf.mxu0
  %v723 = vadd.f32 0.0, %v722
  %724 = vdwg.mxu0
  %v725 = vmul.f32 %v277, %v630
  %v726 = vmul.f32 %v280, %v633
  %v727 = vmul.f32 %v283, %v636
  %v728 = vmul.f32 %v286, %v639
  %v729 = vmul.f32 %v289, %v642
  %v730 = vmul.f32 %v292, %v645
  %v731 = vmul.f32 %v295, %v648
  %v732 = vmul.f32 %v298, %v651
  %v733 = vmul.f32 %v301, %v654
  %v734 = vmul.f32 %v304, %v657
  %v735 = vmul.f32 %v307, %v660
  %v736 = vmul.f32 %v310, %v663
  %v737 = vmul.f32 %v313, %v666
  %v738 = vmul.f32 %v316, %v669
  %v739 = vmul.f32 %v319, %v672
  %v740 = vmul.f32 %v322, %v675
  %v741 = vmul.f32 %v325, %v678
  %v742 = vmul.f32 %v328, %v681
  %v743 = vmul.f32 %v331, %v684
  %v744 = vmul.f32 %v334, %v687
  %v745 = vmul.f32 %v337, %v690
  %v746 = vmul.f32 %v340, %v693
  %v747 = vmul.f32 %v343, %v696
  %v748 = vmul.f32 %v346, %v699
  %v749 = vmul.f32 %v349, %v702
  %v750 = vmul.f32 %v352, %v705
  %v751 = vmul.f32 %v355, %v708
  %v752 = vmul.f32 %v358, %v711
  %v753 = vmul.f32 %v361, %v714
  %v754 = vmul.f32 %v364, %v717
  %v755 = vmul.f32 %v367, %v720
  %v756 = vmul.f32 %v370, %v723
  %vm757 = vcmask 261120
  %v758 = vsel %vm757, %v725, 0.0
  %759 = vadd.xlane.f32.xlu0 %v758
  %v760 = vpop.xlane.xlu0 %759
  %v761 = vsel %vm757, %v726, 0.0
  %762 = vadd.xlane.f32.xlu0 %v761
  %v763 = vpop.xlane.xlu0 %762
  %v764 = vsel %vm757, %v727, 0.0
  %765 = vadd.xlane.f32.xlu0 %v764
  %v766 = vpop.xlane.xlu0 %765
  %v767 = vsel %vm757, %v728, 0.0
  %768 = vadd.xlane.f32.xlu0 %v767
  %v769 = vpop.xlane.xlu0 %768
  %v770 = vsel %vm757, %v729, 0.0
  %771 = vadd.xlane.f32.xlu0 %v770
  %v772 = vpop.xlane.xlu0 %771
  %v773 = vsel %vm757, %v730, 0.0
  %774 = vadd.xlane.f32.xlu0 %v773
  %v775 = vpop.xlane.xlu0 %774
  %v776 = vsel %vm757, %v731, 0.0
  %777 = vadd.xlane.f32.xlu0 %v776
  %v778 = vpop.xlane.xlu0 %777
  %v779 = vsel %vm757, %v732, 0.0
  %780 = vadd.xlane.f32.xlu0 %v779
  %v781 = vpop.xlane.xlu0 %780
  %v782 = vsel %vm757, %v733, 0.0
  %783 = vadd.xlane.f32.xlu0 %v782
  %v784 = vpop.xlane.xlu0 %783
  %v785 = vsel %vm757, %v734, 0.0
  %786 = vadd.xlane.f32.xlu0 %v785
  %v787 = vpop.xlane.xlu0 %786
  %v788 = vsel %vm757, %v735, 0.0
  %789 = vadd.xlane.f32.xlu0 %v788
  %v790 = vpop.xlane.xlu0 %789
  %v791 = vsel %vm757, %v736, 0.0
  %792 = vadd.xlane.f32.xlu0 %v791
  %v793 = vpop.xlane.xlu0 %792
  %v794 = vsel %vm757, %v737, 0.0
  %795 = vadd.xlane.f32.xlu0 %v794
  %v796 = vpop.xlane.xlu0 %795
  %v797 = vsel %vm757, %v738, 0.0
  %798 = vadd.xlane.f32.xlu0 %v797
  %v799 = vpop.xlane.xlu0 %798
  %v800 = vsel %vm757, %v739, 0.0
  %801 = vadd.xlane.f32.xlu0 %v800
  %v802 = vpop.xlane.xlu0 %801
  %v803 = vsel %vm757, %v740, 0.0
  %804 = vadd.xlane.f32.xlu0 %v803
  %v805 = vpop.xlane.xlu0 %804
  %v806 = vsel %vm757, %v741, 0.0
  %807 = vadd.xlane.f32.xlu0 %v806
  %v808 = vpop.xlane.xlu0 %807
  %v809 = vsel %vm757, %v742, 0.0
  %810 = vadd.xlane.f32.xlu0 %v809
  %v811 = vpop.xlane.xlu0 %810
  %v812 = vsel %vm757, %v743, 0.0
  %813 = vadd.xlane.f32.xlu0 %v812
  %v814 = vpop.xlane.xlu0 %813
  %v815 = vsel %vm757, %v744, 0.0
  %816 = vadd.xlane.f32.xlu0 %v815
  %v817 = vpop.xlane.xlu0 %816
  %v818 = vsel %vm757, %v745, 0.0
  %819 = vadd.xlane.f32.xlu0 %v818
  %v820 = vpop.xlane.xlu0 %819
  %v821 = vsel %vm757, %v746, 0.0
  %822 = vadd.xlane.f32.xlu0 %v821
  %v823 = vpop.xlane.xlu0 %822
  %v824 = vsel %vm757, %v747, 0.0
  %825 = vadd.xlane.f32.xlu0 %v824
  %v826 = vpop.xlane.xlu0 %825
  %v827 = vsel %vm757, %v748, 0.0
  %828 = vadd.xlane.f32.xlu0 %v827
  %v829 = vpop.xlane.xlu0 %828
  %v830 = vsel %vm757, %v749, 0.0
  %831 = vadd.xlane.f32.xlu0 %v830
  %v832 = vpop.xlane.xlu0 %831
  %v833 = vsel %vm757, %v750, 0.0
  %834 = vadd.xlane.f32.xlu0 %v833
  %v835 = vpop.xlane.xlu0 %834
  %v836 = vsel %vm757, %v751, 0.0
  %837 = vadd.xlane.f32.xlu0 %v836
  %v838 = vpop.xlane.xlu0 %837
  %v839 = vsel %vm757, %v752, 0.0
  %840 = vadd.xlane.f32.xlu0 %v839
  %v841 = vpop.xlane.xlu0 %840
  %v842 = vsel %vm757, %v753, 0.0
  %843 = vadd.xlane.f32.xlu0 %v842
  %v844 = vpop.xlane.xlu0 %843
  %v845 = vsel %vm757, %v754, 0.0
  %846 = vadd.xlane.f32.xlu0 %v845
  %v847 = vpop.xlane.xlu0 %846
  %v848 = vsel %vm757, %v755, 0.0
  %849 = vadd.xlane.f32.xlu0 %v848
  %v850 = vpop.xlane.xlu0 %849
  %v851 = vsel %vm757, %v756, 0.0
  %852 = vadd.xlane.f32.xlu0 %v851
  %v853 = vpop.xlane.xlu0 %852
  %vm854 = vcmask 7168
  %855 = vst.msk [vmem:[%s4] sm:$0xff] %vm854, %v760
  %856 = vst.msk [vmem:[%s4 + $0x8] sm:$0xff] %vm854, %v763
  %857 = vst.msk [vmem:[%s4 + $0x10] sm:$0xff] %vm854, %v766
  %858 = vst.msk [vmem:[%s4 + $0x18] sm:$0xff] %vm854, %v769
  %859 = vst.msk [vmem:[%s4 + $0x20] sm:$0xff] %vm854, %v772
  %860 = vst.msk [vmem:[%s4 + $0x28] sm:$0xff] %vm854, %v775
  %861 = vst.msk [vmem:[%s4 + $0x30] sm:$0xff] %vm854, %v778
  %862 = vst.msk [vmem:[%s4 + $0x38] sm:$0xff] %vm854, %v781
  %863 = vst.msk [vmem:[%s4 + $0x40] sm:$0xff] %vm854, %v784
  %864 = vst.msk [vmem:[%s4 + $0x48] sm:$0xff] %vm854, %v787
  %865 = vst.msk [vmem:[%s4 + $0x50] sm:$0xff] %vm854, %v790
  %866 = vst.msk [vmem:[%s4 + $0x58] sm:$0xff] %vm854, %v793
  %867 = vst.msk [vmem:[%s4 + $0x60] sm:$0xff] %vm854, %v796
  %868 = vst.msk [vmem:[%s4 + $0x68] sm:$0xff] %vm854, %v799
  %869 = vst.msk [vmem:[%s4 + $0x70] sm:$0xff] %vm854, %v802
  %870 = vst.msk [vmem:[%s4 + $0x78] sm:$0xff] %vm854, %v805
  %871 = vst.msk [vmem:[%s4 + $0x80] sm:$0xff] %vm854, %v808
  %872 = vst.msk [vmem:[%s4 + $0x88] sm:$0xff] %vm854, %v811
  %873 = vst.msk [vmem:[%s4 + $0x90] sm:$0xff] %vm854, %v814
  %874 = vst.msk [vmem:[%s4 + $0x98] sm:$0xff] %vm854, %v817
  %875 = vst.msk [vmem:[%s4 + $0xa0] sm:$0xff] %vm854, %v820
  %876 = vst.msk [vmem:[%s4 + $0xa8] sm:$0xff] %vm854, %v823
  %877 = vst.msk [vmem:[%s4 + $0xb0] sm:$0xff] %vm854, %v826
  %878 = vst.msk [vmem:[%s4 + $0xb8] sm:$0xff] %vm854, %v829
  %879 = vst.msk [vmem:[%s4 + $0xc0] sm:$0xff] %vm854, %v832
  %880 = vst.msk [vmem:[%s4 + $0xc8] sm:$0xff] %vm854, %v835
  %881 = vst.msk [vmem:[%s4 + $0xd0] sm:$0xff] %vm854, %v838
  %882 = vst.msk [vmem:[%s4 + $0xd8] sm:$0xff] %vm854, %v841
  %883 = vst.msk [vmem:[%s4 + $0xe0] sm:$0xff] %vm854, %v844
  %884 = vst.msk [vmem:[%s4 + $0xe8] sm:$0xff] %vm854, %v847
  %885 = vst.msk [vmem:[%s4 + $0xf0] sm:$0xff] %vm854, %v850
  %886 = vst.msk [vmem:[%s4 + $0xf8] sm:$0xff] %vm854, %v853
  // Predicated region
  $region18: #{tpu_custom_call.1} parent=0 // pred_check
    _
  $region19: #{tpu_custom_call.1} parent=0 // pred_check_branch
    %888 = sbr.rel (0) target = $region21
  $region20: #{tpu_custom_call.1} parent=0 // pred_region
    _
  $region21: #{tpu_custom_call.1} parent=0 // pred_fallthru
    _
  // Predicated region
  $region22: #{tpu_custom_call.1} parent=0 // pred_check
    _
  $region23: #{tpu_custom_call.1} parent=0 // pred_check_branch
    %890 = sbr.rel (0) target = $region25
  $region24: #{tpu_custom_call.1} parent=0 // pred_region
    _
  $region25: #{tpu_custom_call.1} parent=0 // pred_fallthru
    _

</llo_original>
